<compile_context>
chip_gen: v6e
topology: v6e:2x2x1
jax: 0.10.0
libtpu: 0.0.40
codegen_flags: <defaults>
</compile_context>

<pallas_src>
import functools

import jax
import jax.numpy as jnp
from jax.experimental import pallas as pl
from jax.experimental.pallas import tpu as pltpu

PATCH_GRID = 6  # `patch_size` in the PyTorch module == number of patches per side


def _fused_patch_encode_kernel(x_ref, w_ref, pb_ref, o_ref, lhs_ref, *,
                               block_batch, channels, patch_grid, kernel_size):
    """Fused patch extraction + patch embedding for one block of images.

    x_ref  : (Bn, C, H, W)     natural NCHW block (W = lane dim, no relayout padding)
    w_ref  : (C*P*W, k*d)      delta-expanded, patch-permuted projection weight
    pb_ref : (Bn*k, k*d)       position embedding + bias, pre-tiled over the block
    o_ref  : (Bn*k, k*d)       row-major identical to (Bn, k*k, d); lane dense
    lhs_ref: (Bn*k, C*P*W)     VMEM scratch holding the matmul LHS
    """
    Bn, C, P, k = block_batch, channels, patch_grid, kernel_size
    W = P * k

    # Stage 1: gather the (b, i)-major LHS.  Each copy moves a full (k, W) slab
    # with the image row (all W lanes) kept intact -> only offset placement,
    # no lane splits / rotates.  Bn*C*P copies per grid step (144 at the real
    # module size with Bn=8) instead of thousands of 12-lane masked strips.
    for b in range(Bn):
        for c in range(C):
            for pi in range(P):
                m = c * P + pi
                lhs_ref[b * k:(b + 1) * k, m * W:(m + 1) * W] = (
                    x_ref[b, c, pi * k:(pi + 1) * k, :])

    # Stage 2: a single dense MXU matmul performs the projection; the patch
    # permutation lives entirely in the (static) weight expansion.
    out = jnp.dot(lhs_ref[...], w_ref[...], preferred_element_type=jnp.float32)
    o_ref[...] = (out + pb_ref[...]).astype(o_ref.dtype)


def _pick_block_batch(n, k, max_bn=8):
    """Pick the per-step batch Bn.

    Constraints / preferences:
      * n % Bn == 0
      * (Bn * k) % 8 == 0 so the (Bn*k, k*d) output block satisfies the (8,128)
        tiling rule (otherwise fall back to a single full-array block).
      * prefer an even grid (balanced work across the two v7x TensorCores).
    On single-core v5e/v6e (128 MiB VMEM) `max_bn` can be raised to 16-32.
    """
    cands = [bn for bn in range(min(max_bn, n), 0, -1)
             if n % bn == 0 and (bn * k) % 8 == 0]
    for bn in cands:
        if (n // bn) % 2 == 0:
            return bn
    if cands:
        return cands[0]
    return n  # single full-array block: always a legal BlockSpec


def _expand_projection_weight(w_proj, channels, patch_grid, kernel_size):
    """Absorb the patch relayout into the projection weight (done once, in XLA).

    w_proj: (d, Q) with Q = P*P*C and q = (pi*P + pj)*C + c  (PyTorch Linear layout)
    Returns Wbig of shape (C*P*W, k*d) with
      Wbig[(c*P+pi)*W + pj*k + jj, j*d + dd] = w_proj[dd, (pi*P+pj)*C + c] * (jj == j)
    so that for lhs[(b,i), (c*P+pi)*W + w] = x[b, c, pi*k+i, w]:
      (lhs @ Wbig)[(b,i), j*d+dd] = sum_{c,pi,pj} x[b,c,pi*k+i,pj*k+j] * w_proj[dd, q].
    """
    P, C, k = patch_grid, channels, kernel_size
    d = w_proj.shape[0]
    wq = jnp.transpose(w_proj).reshape(P, P, C, d)   # [pi, pj, c, dd]
    eye = jnp.eye(k, dtype=w_proj.dtype)             # [jj, j]
    wbig = jnp.einsum('pqcd,xj->cpqxjd', wq, eye)    # [c, pi, pj, jj, j, dd]
    return wbig.reshape(C * P * P * k, k * d)


def patch_encode(x, w_proj, b_proj, pos_emb, patch_grid=PATCH_GRID, max_bn=8):
    """Fused `Patches` + `PatchEncoder` forward.

    x        : (N, C, H, W), H == W
    w_proj   : (d, P*P*C)    PatchEncoder.projection.weight
    b_proj   : (d,)          PatchEncoder.projection.bias
    pos_emb  : (k*k, d)      PatchEncoder.position_embedding.weight
    returns  : (N, k*k, d)   PatchEncoder output (before Vit_model's final permute)
    """
    N, C, H, W = x.shape
    assert H == W, "Patches module requires square images"
    P = patch_grid
    assert H % P == 0, "image size must be divisible by patch_size"
    k = H // P
    d = w_proj.shape[0]
    S = k * k
    assert w_proj.shape == (d, P * P * C)
    assert b_proj.shape == (d,)
    assert pos_emb.shape == (S, d)

    Bn = _pick_block_batch(N, k, max_bn=max_bn)
    grid = (N // Bn,)
    KW = C * P * W  # contraction length of the expanded matmul (= C*P*P*k)

    # Static (per-call) weight / bias preparation in the wrapper.
    wbig = _expand_projection_weight(w_proj, C, P, k)                  # (KW, k*d)
    pb_row = (pos_emb.reshape(k, k, d) + b_proj).reshape(k, k * d)     # (k, k*d)
    pb = jnp.tile(pb_row, (Bn, 1))                                     # (Bn*k, k*d)

    kernel = functools.partial(
        _fused_patch_encode_kernel,
        block_batch=Bn, channels=C, patch_grid=P, kernel_size=k)

    out = pl.pallas_call(
        kernel,
        out_shape=jax.ShapeDtypeStruct((N * k, k * d), x.dtype),
        grid=grid,
        in_specs=[
            # Natural NCHW block: trailing dims equal the full (H, W) extents.
            pl.BlockSpec((Bn, C, H, W), lambda n: (n, 0, 0, 0)),
            # Expanded weight: constant block index -> fetched once, stays resident.
            pl.BlockSpec((KW, k * d), lambda n: (0, 0)),
            # Position embedding + bias, pre-tiled to the block row count.
            pl.BlockSpec((Bn * k, k * d), lambda n: (0, 0)),
        ],
        out_specs=pl.BlockSpec((Bn * k, k * d), lambda n: (n, 0)),
        scratch_shapes=[pltpu.VMEM((Bn * k, KW), jnp.float32)],
        compiler_params=pltpu.CompilerParams(
            dimension_semantics=("parallel",),
            vmem_limit_bytes=32 * 1024 * 1024,
        ),
    )(x, wbig, pb)

    # Row-major (N*k, k*d) is bit-identical to (N, k*k, d): metadata-only reshape.
    return out.reshape(N, S, d)


def patch_encode_ref(x, w_proj, b_proj, pos_emb, patch_grid=PATCH_GRID):
    """Pure-JAX reference of the fused Patches + PatchEncoder forward."""
    N, C, H, W = x.shape
    P = patch_grid
    k = H // P
    x6 = x.reshape(N, C, P, k, P, k)
    # patches (N, P*P, C, k, k) -> view(N, P*P*C, k*k) -> permute -> (N, k*k, P*P*C)
    patches = jnp.transpose(x6, (0, 2, 4, 1, 3, 5)).reshape(N, P * P * C, k * k)
    pf = jnp.transpose(patches, (0, 2, 1))
    return pf @ w_proj.T + b_proj + pos_emb


if __name__ == "__main__":
    key = jax.random.PRNGKey(0)

    P = PATCH_GRID
    C = 3
    d = 64  # projection_dim in the module

    # Small shape consistent with the module (P=6 patches per side, C=3) plus the
    # real module size (image 72 -> k=12, 144 positions, Linear(108, 64)), as
    # requested by the review.
    cases = [
        (2, 24),   # (N, image_size): k=4,  S=16,  Q=108
        (2, 72),   # real module size: k=12, S=144, Q=108
    ]

    for idx, (N, img) in enumerate(cases):
        k = img // P
        S = k * k
        Q = P * P * C
        kk = jax.random.fold_in(key, idx)
        k1, k2, k3, k4 = jax.random.split(kk, 4)
        x = jax.random.normal(k1, (N, C, img, img), dtype=jnp.float32)
        w_proj = jax.random.normal(k2, (d, Q), dtype=jnp.float32) * 0.05
        b_proj = jax.random.normal(k3, (d,), dtype=jnp.float32) * 0.05
        pos_emb = jax.random.normal(k4, (S, d), dtype=jnp.float32) * 0.02

        out = jax.block_until_ready(patch_encode(x, w_proj, b_proj, pos_emb))
        ref = patch_encode_ref(x, w_proj, b_proj, pos_emb)
        assert out.shape == (N, S, d), out.shape
        max_err = jnp.max(jnp.abs(out - ref))
        assert jnp.allclose(out, ref, rtol=1e-3, atol=1e-3), (
            f"fused patch-encode mismatch at case {idx}: max abs err {max_err}")

    print("KERNEL_OK")
</pallas_src>

<mosaic_0001>
module attributes {stable_mosaic.version = 11 : i64} {
  func.func @_fused_patch_encode_kernel(%arg0: i32, %arg1: memref<2x3x24x24xf32, #tpu.memory_space<vmem>>, %arg2: memref<432x256xf32, #tpu.memory_space<vmem>>, %arg3: memref<8x256xf32, #tpu.memory_space<vmem>>, %arg4: memref<8x256xf32, #tpu.memory_space<vmem>>, %arg5: memref<8x432xf32, #tpu.memory_space<vmem>>) attributes {dimension_semantics = [#tpu.dimension_semantics<parallel>], iteration_bounds = array<i64: 1>, scalar_prefetch = 0 : i64, scratch_operands = 1 : i64, tpu.core_type = #tpu.core_type<tc>, window_params = [{transform_indices = @transform_0, window_bounds = array<i64: 2, 3, 24, 24>}, {pipeline_mode = #tpu.pipeline_mode<synchronous>, transform_indices = @transform_1, window_bounds = array<i64: 432, 256>}, {pipeline_mode = #tpu.pipeline_mode<synchronous>, transform_indices = @transform_2, window_bounds = array<i64: 8, 256>}, {transform_indices = @transform_3, window_bounds = array<i64: 8, 256>}]} {
    %c0 = arith.constant 0 : index
    %c0_0 = arith.constant 0 : index
    %c0_1 = arith.constant 0 : index
    %c0_2 = arith.constant 0 : index
    %0 = vector.load %arg1[%c0, %c0_0, %c0_1, %c0_2] : memref<2x3x24x24xf32, #tpu.memory_space<vmem>>, vector<1x1x4x24xf32>
    %1 = vector.shape_cast %0 : vector<1x1x4x24xf32> to vector<4x24xf32>
    %c0_3 = arith.constant 0 : index
    %c0_4 = arith.constant 0 : index
    %2 = vector.load %arg5[%c0_3, %c0_4] : memref<8x432xf32, #tpu.memory_space<vmem>>, vector<4x24xf32>
    tpu.vector_store %arg5[%c0_3, %c0_4], %1 {strides = array<i32>} : memref<8x432xf32, #tpu.memory_space<vmem>>, vector<4x24xf32>,
    %c0_5 = arith.constant 0 : index
    %c0_6 = arith.constant 0 : index
    %c4 = arith.constant 4 : index
    %c0_7 = arith.constant 0 : index
    %3 = vector.load %arg1[%c0_5, %c0_6, %c4, %c0_7] : memref<2x3x24x24xf32, #tpu.memory_space<vmem>>, vector<1x1x4x24xf32>
    %4 = vector.shape_cast %3 : vector<1x1x4x24xf32> to vector<4x24xf32>
    %c0_8 = arith.constant 0 : index
    %c24 = arith.constant 24 : index
    %5 = vector.load %arg5[%c0_8, %c24] : memref<8x432xf32, #tpu.memory_space<vmem>>, vector<4x24xf32>
    tpu.vector_store %arg5[%c0_8, %c24], %4 {strides = array<i32>} : memref<8x432xf32, #tpu.memory_space<vmem>>, vector<4x24xf32>,
    %c0_9 = arith.constant 0 : index
    %c0_10 = arith.constant 0 : index
    %c8 = arith.constant 8 : index
    %c0_11 = arith.constant 0 : index
    %6 = vector.load %arg1[%c0_9, %c0_10, %c8, %c0_11] : memref<2x3x24x24xf32, #tpu.memory_space<vmem>>, vector<1x1x4x24xf32>
    %7 = vector.shape_cast %6 : vector<1x1x4x24xf32> to vector<4x24xf32>
    %c0_12 = arith.constant 0 : index
    %c48 = arith.constant 48 : index
    %8 = vector.load %arg5[%c0_12, %c48] : memref<8x432xf32, #tpu.memory_space<vmem>>, vector<4x24xf32>
    tpu.vector_store %arg5[%c0_12, %c48], %7 {strides = array<i32>} : memref<8x432xf32, #tpu.memory_space<vmem>>, vector<4x24xf32>,
    %c0_13 = arith.constant 0 : index
    %c0_14 = arith.constant 0 : index
    %c12 = arith.constant 12 : index
    %c0_15 = arith.constant 0 : index
    %9 = vector.load %arg1[%c0_13, %c0_14, %c12, %c0_15] : memref<2x3x24x24xf32, #tpu.memory_space<vmem>>, vector<1x1x4x24xf32>
    %10 = vector.shape_cast %9 : vector<1x1x4x24xf32> to vector<4x24xf32>
    %c0_16 = arith.constant 0 : index
    %c72 = arith.constant 72 : index
    %11 = vector.load %arg5[%c0_16, %c72] : memref<8x432xf32, #tpu.memory_space<vmem>>, vector<4x24xf32>
    tpu.vector_store %arg5[%c0_16, %c72], %10 {strides = array<i32>} : memref<8x432xf32, #tpu.memory_space<vmem>>, vector<4x24xf32>,
    %c0_17 = arith.constant 0 : index
    %c0_18 = arith.constant 0 : index
    %c16 = arith.constant 16 : index
    %c0_19 = arith.constant 0 : index
    %12 = vector.load %arg1[%c0_17, %c0_18, %c16, %c0_19] : memref<2x3x24x24xf32, #tpu.memory_space<vmem>>, vector<1x1x4x24xf32>
    %13 = vector.shape_cast %12 : vector<1x1x4x24xf32> to vector<4x24xf32>
    %c0_20 = arith.constant 0 : index
    %c96 = arith.constant 96 : index
    %14 = vector.load %arg5[%c0_20, %c96] : memref<8x432xf32, #tpu.memory_space<vmem>>, vector<4x24xf32>
    tpu.vector_store %arg5[%c0_20, %c96], %13 {strides = array<i32>} : memref<8x432xf32, #tpu.memory_space<vmem>>, vector<4x24xf32>,
    %c0_21 = arith.constant 0 : index
    %c0_22 = arith.constant 0 : index
    %c20 = arith.constant 20 : index
    %c0_23 = arith.constant 0 : index
    %15 = vector.load %arg1[%c0_21, %c0_22, %c20, %c0_23] : memref<2x3x24x24xf32, #tpu.memory_space<vmem>>, vector<1x1x4x24xf32>
    %16 = vector.shape_cast %15 : vector<1x1x4x24xf32> to vector<4x24xf32>
    %c0_24 = arith.constant 0 : index
    %c120 = arith.constant 120 : index
    %17 = vector.load %arg5[%c0_24, %c120] : memref<8x432xf32, #tpu.memory_space<vmem>>, vector<4x24xf32>
    tpu.vector_store %arg5[%c0_24, %c120], %16 {strides = array<i32>} : memref<8x432xf32, #tpu.memory_space<vmem>>, vector<4x24xf32>,
    %c0_25 = arith.constant 0 : index
    %c1 = arith.constant 1 : index
    %c0_26 = arith.constant 0 : index
    %c0_27 = arith.constant 0 : index
    %18 = vector.load %arg1[%c0_25, %c1, %c0_26, %c0_27] : memref<2x3x24x24xf32, #tpu.memory_space<vmem>>, vector<1x1x4x24xf32>
    %19 = vector.shape_cast %18 : vector<1x1x4x24xf32> to vector<4x24xf32>
    %c0_28 = arith.constant 0 : index
    %c144 = arith.constant 144 : index
    %20 = vector.load %arg5[%c0_28, %c144] : memref<8x432xf32, #tpu.memory_space<vmem>>, vector<4x24xf32>
    tpu.vector_store %arg5[%c0_28, %c144], %19 {strides = array<i32>} : memref<8x432xf32, #tpu.memory_space<vmem>>, vector<4x24xf32>,
    %c0_29 = arith.constant 0 : index
    %c1_30 = arith.constant 1 : index
    %c4_31 = arith.constant 4 : index
    %c0_32 = arith.constant 0 : index
    %21 = vector.load %arg1[%c0_29, %c1_30, %c4_31, %c0_32] : memref<2x3x24x24xf32, #tpu.memory_space<vmem>>, vector<1x1x4x24xf32>
    %22 = vector.shape_cast %21 : vector<1x1x4x24xf32> to vector<4x24xf32>
    %c0_33 = arith.constant 0 : index
    %c168 = arith.constant 168 : index
    %23 = vector.load %arg5[%c0_33, %c168] : memref<8x432xf32, #tpu.memory_space<vmem>>, vector<4x24xf32>
    tpu.vector_store %arg5[%c0_33, %c168], %22 {strides = array<i32>} : memref<8x432xf32, #tpu.memory_space<vmem>>, vector<4x24xf32>,
    %c0_34 = arith.constant 0 : index
    %c1_35 = arith.constant 1 : index
    %c8_36 = arith.constant 8 : index
    %c0_37 = arith.constant 0 : index
    %24 = vector.load %arg1[%c0_34, %c1_35, %c8_36, %c0_37] : memref<2x3x24x24xf32, #tpu.memory_space<vmem>>, vector<1x1x4x24xf32>
    %25 = vector.shape_cast %24 : vector<1x1x4x24xf32> to vector<4x24xf32>
    %c0_38 = arith.constant 0 : index
    %c192 = arith.constant 192 : index
    %26 = vector.load %arg5[%c0_38, %c192] : memref<8x432xf32, #tpu.memory_space<vmem>>, vector<4x24xf32>
    tpu.vector_store %arg5[%c0_38, %c192], %25 {strides = array<i32>} : memref<8x432xf32, #tpu.memory_space<vmem>>, vector<4x24xf32>,
    %c0_39 = arith.constant 0 : index
    %c1_40 = arith.constant 1 : index
    %c12_41 = arith.constant 12 : index
    %c0_42 = arith.constant 0 : index
    %27 = vector.load %arg1[%c0_39, %c1_40, %c12_41, %c0_42] : memref<2x3x24x24xf32, #tpu.memory_space<vmem>>, vector<1x1x4x24xf32>
    %28 = vector.shape_cast %27 : vector<1x1x4x24xf32> to vector<4x24xf32>
    %c0_43 = arith.constant 0 : index
    %c216 = arith.constant 216 : index
    %29 = vector.load %arg5[%c0_43, %c216] : memref<8x432xf32, #tpu.memory_space<vmem>>, vector<4x24xf32>
    tpu.vector_store %arg5[%c0_43, %c216], %28 {strides = array<i32>} : memref<8x432xf32, #tpu.memory_space<vmem>>, vector<4x24xf32>,
    %c0_44 = arith.constant 0 : index
    %c1_45 = arith.constant 1 : index
    %c16_46 = arith.constant 16 : index
    %c0_47 = arith.constant 0 : index
    %30 = vector.load %arg1[%c0_44, %c1_45, %c16_46, %c0_47] : memref<2x3x24x24xf32, #tpu.memory_space<vmem>>, vector<1x1x4x24xf32>
    %31 = vector.shape_cast %30 : vector<1x1x4x24xf32> to vector<4x24xf32>
    %c0_48 = arith.constant 0 : index
    %c240 = arith.constant 240 : index
    %32 = vector.load %arg5[%c0_48, %c240] : memref<8x432xf32, #tpu.memory_space<vmem>>, vector<4x24xf32>
    tpu.vector_store %arg5[%c0_48, %c240], %31 {strides = array<i32>} : memref<8x432xf32, #tpu.memory_space<vmem>>, vector<4x24xf32>,
    %c0_49 = arith.constant 0 : index
    %c1_50 = arith.constant 1 : index
    %c20_51 = arith.constant 20 : index
    %c0_52 = arith.constant 0 : index
    %33 = vector.load %arg1[%c0_49, %c1_50, %c20_51, %c0_52] : memref<2x3x24x24xf32, #tpu.memory_space<vmem>>, vector<1x1x4x24xf32>
    %34 = vector.shape_cast %33 : vector<1x1x4x24xf32> to vector<4x24xf32>
    %c0_53 = arith.constant 0 : index
    %c264 = arith.constant 264 : index
    %35 = vector.load %arg5[%c0_53, %c264] : memref<8x432xf32, #tpu.memory_space<vmem>>, vector<4x24xf32>
    tpu.vector_store %arg5[%c0_53, %c264], %34 {strides = array<i32>} : memref<8x432xf32, #tpu.memory_space<vmem>>, vector<4x24xf32>,
    %c0_54 = arith.constant 0 : index
    %c2 = arith.constant 2 : index
    %c0_55 = arith.constant 0 : index
    %c0_56 = arith.constant 0 : index
    %36 = vector.load %arg1[%c0_54, %c2, %c0_55, %c0_56] : memref<2x3x24x24xf32, #tpu.memory_space<vmem>>, vector<1x1x4x24xf32>
    %37 = vector.shape_cast %36 : vector<1x1x4x24xf32> to vector<4x24xf32>
    %c0_57 = arith.constant 0 : index
    %c288 = arith.constant 288 : index
    %38 = vector.load %arg5[%c0_57, %c288] : memref<8x432xf32, #tpu.memory_space<vmem>>, vector<4x24xf32>
    tpu.vector_store %arg5[%c0_57, %c288], %37 {strides = array<i32>} : memref<8x432xf32, #tpu.memory_space<vmem>>, vector<4x24xf32>,
    %c0_58 = arith.constant 0 : index
    %c2_59 = arith.constant 2 : index
    %c4_60 = arith.constant 4 : index
    %c0_61 = arith.constant 0 : index
    %39 = vector.load %arg1[%c0_58, %c2_59, %c4_60, %c0_61] : memref<2x3x24x24xf32, #tpu.memory_space<vmem>>, vector<1x1x4x24xf32>
    %40 = vector.shape_cast %39 : vector<1x1x4x24xf32> to vector<4x24xf32>
    %c0_62 = arith.constant 0 : index
    %c312 = arith.constant 312 : index
    %41 = vector.load %arg5[%c0_62, %c312] : memref<8x432xf32, #tpu.memory_space<vmem>>, vector<4x24xf32>
    tpu.vector_store %arg5[%c0_62, %c312], %40 {strides = array<i32>} : memref<8x432xf32, #tpu.memory_space<vmem>>, vector<4x24xf32>,
    %c0_63 = arith.constant 0 : index
    %c2_64 = arith.constant 2 : index
    %c8_65 = arith.constant 8 : index
    %c0_66 = arith.constant 0 : index
    %42 = vector.load %arg1[%c0_63, %c2_64, %c8_65, %c0_66] : memref<2x3x24x24xf32, #tpu.memory_space<vmem>>, vector<1x1x4x24xf32>
    %43 = vector.shape_cast %42 : vector<1x1x4x24xf32> to vector<4x24xf32>
    %c0_67 = arith.constant 0 : index
    %c336 = arith.constant 336 : index
    %44 = vector.load %arg5[%c0_67, %c336] : memref<8x432xf32, #tpu.memory_space<vmem>>, vector<4x24xf32>
    tpu.vector_store %arg5[%c0_67, %c336], %43 {strides = array<i32>} : memref<8x432xf32, #tpu.memory_space<vmem>>, vector<4x24xf32>,
    %c0_68 = arith.constant 0 : index
    %c2_69 = arith.constant 2 : index
    %c12_70 = arith.constant 12 : index
    %c0_71 = arith.constant 0 : index
    %45 = vector.load %arg1[%c0_68, %c2_69, %c12_70, %c0_71] : memref<2x3x24x24xf32, #tpu.memory_space<vmem>>, vector<1x1x4x24xf32>
    %46 = vector.shape_cast %45 : vector<1x1x4x24xf32> to vector<4x24xf32>
    %c0_72 = arith.constant 0 : index
    %c360 = arith.constant 360 : index
    %47 = vector.load %arg5[%c0_72, %c360] : memref<8x432xf32, #tpu.memory_space<vmem>>, vector<4x24xf32>
    tpu.vector_store %arg5[%c0_72, %c360], %46 {strides = array<i32>} : memref<8x432xf32, #tpu.memory_space<vmem>>, vector<4x24xf32>,
    %c0_73 = arith.constant 0 : index
    %c2_74 = arith.constant 2 : index
    %c16_75 = arith.constant 16 : index
    %c0_76 = arith.constant 0 : index
    %48 = vector.load %arg1[%c0_73, %c2_74, %c16_75, %c0_76] : memref<2x3x24x24xf32, #tpu.memory_space<vmem>>, vector<1x1x4x24xf32>
    %49 = vector.shape_cast %48 : vector<1x1x4x24xf32> to vector<4x24xf32>
    %c0_77 = arith.constant 0 : index
    %c384 = arith.constant 384 : index
    %50 = vector.load %arg5[%c0_77, %c384] : memref<8x432xf32, #tpu.memory_space<vmem>>, vector<4x24xf32>
    tpu.vector_store %arg5[%c0_77, %c384], %49 {strides = array<i32>} : memref<8x432xf32, #tpu.memory_space<vmem>>, vector<4x24xf32>,
    %c0_78 = arith.constant 0 : index
    %c2_79 = arith.constant 2 : index
    %c20_80 = arith.constant 20 : index
    %c0_81 = arith.constant 0 : index
    %51 = vector.load %arg1[%c0_78, %c2_79, %c20_80, %c0_81] : memref<2x3x24x24xf32, #tpu.memory_space<vmem>>, vector<1x1x4x24xf32>
    %52 = vector.shape_cast %51 : vector<1x1x4x24xf32> to vector<4x24xf32>
    %c0_82 = arith.constant 0 : index
    %c408 = arith.constant 408 : index
    %53 = vector.load %arg5[%c0_82, %c408] : memref<8x432xf32, #tpu.memory_space<vmem>>, vector<4x24xf32>
    tpu.vector_store %arg5[%c0_82, %c408], %52 {strides = array<i32>} : memref<8x432xf32, #tpu.memory_space<vmem>>, vector<4x24xf32>,
    %c1_83 = arith.constant 1 : index
    %c0_84 = arith.constant 0 : index
    %c0_85 = arith.constant 0 : index
    %c0_86 = arith.constant 0 : index
    %54 = vector.load %arg1[%c1_83, %c0_84, %c0_85, %c0_86] : memref<2x3x24x24xf32, #tpu.memory_space<vmem>>, vector<1x1x4x24xf32>
    %55 = vector.shape_cast %54 : vector<1x1x4x24xf32> to vector<4x24xf32>
    %c4_87 = arith.constant 4 : index
    %c0_88 = arith.constant 0 : index
    %56 = vector.load %arg5[%c4_87, %c0_88] : memref<8x432xf32, #tpu.memory_space<vmem>>, vector<4x24xf32>
    tpu.vector_store %arg5[%c4_87, %c0_88], %55 {strides = array<i32>} : memref<8x432xf32, #tpu.memory_space<vmem>>, vector<4x24xf32>,
    %c1_89 = arith.constant 1 : index
    %c0_90 = arith.constant 0 : index
    %c4_91 = arith.constant 4 : index
    %c0_92 = arith.constant 0 : index
    %57 = vector.load %arg1[%c1_89, %c0_90, %c4_91, %c0_92] : memref<2x3x24x24xf32, #tpu.memory_space<vmem>>, vector<1x1x4x24xf32>
    %58 = vector.shape_cast %57 : vector<1x1x4x24xf32> to vector<4x24xf32>
    %c4_93 = arith.constant 4 : index
    %c24_94 = arith.constant 24 : index
    %59 = vector.load %arg5[%c4_93, %c24_94] : memref<8x432xf32, #tpu.memory_space<vmem>>, vector<4x24xf32>
    tpu.vector_store %arg5[%c4_93, %c24_94], %58 {strides = array<i32>} : memref<8x432xf32, #tpu.memory_space<vmem>>, vector<4x24xf32>,
    %c1_95 = arith.constant 1 : index
    %c0_96 = arith.constant 0 : index
    %c8_97 = arith.constant 8 : index
    %c0_98 = arith.constant 0 : index
    %60 = vector.load %arg1[%c1_95, %c0_96, %c8_97, %c0_98] : memref<2x3x24x24xf32, #tpu.memory_space<vmem>>, vector<1x1x4x24xf32>
    %61 = vector.shape_cast %60 : vector<1x1x4x24xf32> to vector<4x24xf32>
    %c4_99 = arith.constant 4 : index
    %c48_100 = arith.constant 48 : index
    %62 = vector.load %arg5[%c4_99, %c48_100] : memref<8x432xf32, #tpu.memory_space<vmem>>, vector<4x24xf32>
    tpu.vector_store %arg5[%c4_99, %c48_100], %61 {strides = array<i32>} : memref<8x432xf32, #tpu.memory_space<vmem>>, vector<4x24xf32>,
    %c1_101 = arith.constant 1 : index
    %c0_102 = arith.constant 0 : index
    %c12_103 = arith.constant 12 : index
    %c0_104 = arith.constant 0 : index
    %63 = vector.load %arg1[%c1_101, %c0_102, %c12_103, %c0_104] : memref<2x3x24x24xf32, #tpu.memory_space<vmem>>, vector<1x1x4x24xf32>
    %64 = vector.shape_cast %63 : vector<1x1x4x24xf32> to vector<4x24xf32>
    %c4_105 = arith.constant 4 : index
    %c72_106 = arith.constant 72 : index
    %65 = vector.load %arg5[%c4_105, %c72_106] : memref<8x432xf32, #tpu.memory_space<vmem>>, vector<4x24xf32>
    tpu.vector_store %arg5[%c4_105, %c72_106], %64 {strides = array<i32>} : memref<8x432xf32, #tpu.memory_space<vmem>>, vector<4x24xf32>,
    %c1_107 = arith.constant 1 : index
    %c0_108 = arith.constant 0 : index
    %c16_109 = arith.constant 16 : index
    %c0_110 = arith.constant 0 : index
    %66 = vector.load %arg1[%c1_107, %c0_108, %c16_109, %c0_110] : memref<2x3x24x24xf32, #tpu.memory_space<vmem>>, vector<1x1x4x24xf32>
    %67 = vector.shape_cast %66 : vector<1x1x4x24xf32> to vector<4x24xf32>
    %c4_111 = arith.constant 4 : index
    %c96_112 = arith.constant 96 : index
    %68 = vector.load %arg5[%c4_111, %c96_112] : memref<8x432xf32, #tpu.memory_space<vmem>>, vector<4x24xf32>
    tpu.vector_store %arg5[%c4_111, %c96_112], %67 {strides = array<i32>} : memref<8x432xf32, #tpu.memory_space<vmem>>, vector<4x24xf32>,
    %c1_113 = arith.constant 1 : index
    %c0_114 = arith.constant 0 : index
    %c20_115 = arith.constant 20 : index
    %c0_116 = arith.constant 0 : index
    %69 = vector.load %arg1[%c1_113, %c0_114, %c20_115, %c0_116] : memref<2x3x24x24xf32, #tpu.memory_space<vmem>>, vector<1x1x4x24xf32>
    %70 = vector.shape_cast %69 : vector<1x1x4x24xf32> to vector<4x24xf32>
    %c4_117 = arith.constant 4 : index
    %c120_118 = arith.constant 120 : index
    %71 = vector.load %arg5[%c4_117, %c120_118] : memref<8x432xf32, #tpu.memory_space<vmem>>, vector<4x24xf32>
    tpu.vector_store %arg5[%c4_117, %c120_118], %70 {strides = array<i32>} : memref<8x432xf32, #tpu.memory_space<vmem>>, vector<4x24xf32>,
    %c1_119 = arith.constant 1 : index
    %c1_120 = arith.constant 1 : index
    %c0_121 = arith.constant 0 : index
    %c0_122 = arith.constant 0 : index
    %72 = vector.load %arg1[%c1_119, %c1_120, %c0_121, %c0_122] : memref<2x3x24x24xf32, #tpu.memory_space<vmem>>, vector<1x1x4x24xf32>
    %73 = vector.shape_cast %72 : vector<1x1x4x24xf32> to vector<4x24xf32>
    %c4_123 = arith.constant 4 : index
    %c144_124 = arith.constant 144 : index
    %74 = vector.load %arg5[%c4_123, %c144_124] : memref<8x432xf32, #tpu.memory_space<vmem>>, vector<4x24xf32>
    tpu.vector_store %arg5[%c4_123, %c144_124], %73 {strides = array<i32>} : memref<8x432xf32, #tpu.memory_space<vmem>>, vector<4x24xf32>,
    %c1_125 = arith.constant 1 : index
    %c1_126 = arith.constant 1 : index
    %c4_127 = arith.constant 4 : index
    %c0_128 = arith.constant 0 : index
    %75 = vector.load %arg1[%c1_125, %c1_126, %c4_127, %c0_128] : memref<2x3x24x24xf32, #tpu.memory_space<vmem>>, vector<1x1x4x24xf32>
    %76 = vector.shape_cast %75 : vector<1x1x4x24xf32> to vector<4x24xf32>
    %c4_129 = arith.constant 4 : index
    %c168_130 = arith.constant 168 : index
    %77 = vector.load %arg5[%c4_129, %c168_130] : memref<8x432xf32, #tpu.memory_space<vmem>>, vector<4x24xf32>
    tpu.vector_store %arg5[%c4_129, %c168_130], %76 {strides = array<i32>} : memref<8x432xf32, #tpu.memory_space<vmem>>, vector<4x24xf32>,
    %c1_131 = arith.constant 1 : index
    %c1_132 = arith.constant 1 : index
    %c8_133 = arith.constant 8 : index
    %c0_134 = arith.constant 0 : index
    %78 = vector.load %arg1[%c1_131, %c1_132, %c8_133, %c0_134] : memref<2x3x24x24xf32, #tpu.memory_space<vmem>>, vector<1x1x4x24xf32>
    %79 = vector.shape_cast %78 : vector<1x1x4x24xf32> to vector<4x24xf32>
    %c4_135 = arith.constant 4 : index
    %c192_136 = arith.constant 192 : index
    %80 = vector.load %arg5[%c4_135, %c192_136] : memref<8x432xf32, #tpu.memory_space<vmem>>, vector<4x24xf32>
    tpu.vector_store %arg5[%c4_135, %c192_136], %79 {strides = array<i32>} : memref<8x432xf32, #tpu.memory_space<vmem>>, vector<4x24xf32>,
    %c1_137 = arith.constant 1 : index
    %c1_138 = arith.constant 1 : index
    %c12_139 = arith.constant 12 : index
    %c0_140 = arith.constant 0 : index
    %81 = vector.load %arg1[%c1_137, %c1_138, %c12_139, %c0_140] : memref<2x3x24x24xf32, #tpu.memory_space<vmem>>, vector<1x1x4x24xf32>
    %82 = vector.shape_cast %81 : vector<1x1x4x24xf32> to vector<4x24xf32>
    %c4_141 = arith.constant 4 : index
    %c216_142 = arith.constant 216 : index
    %83 = vector.load %arg5[%c4_141, %c216_142] : memref<8x432xf32, #tpu.memory_space<vmem>>, vector<4x24xf32>
    tpu.vector_store %arg5[%c4_141, %c216_142], %82 {strides = array<i32>} : memref<8x432xf32, #tpu.memory_space<vmem>>, vector<4x24xf32>,
    %c1_143 = arith.constant 1 : index
    %c1_144 = arith.constant 1 : index
    %c16_145 = arith.constant 16 : index
    %c0_146 = arith.constant 0 : index
    %84 = vector.load %arg1[%c1_143, %c1_144, %c16_145, %c0_146] : memref<2x3x24x24xf32, #tpu.memory_space<vmem>>, vector<1x1x4x24xf32>
    %85 = vector.shape_cast %84 : vector<1x1x4x24xf32> to vector<4x24xf32>
    %c4_147 = arith.constant 4 : index
    %c240_148 = arith.constant 240 : index
    %86 = vector.load %arg5[%c4_147, %c240_148] : memref<8x432xf32, #tpu.memory_space<vmem>>, vector<4x24xf32>
    tpu.vector_store %arg5[%c4_147, %c240_148], %85 {strides = array<i32>} : memref<8x432xf32, #tpu.memory_space<vmem>>, vector<4x24xf32>,
    %c1_149 = arith.constant 1 : index
    %c1_150 = arith.constant 1 : index
    %c20_151 = arith.constant 20 : index
    %c0_152 = arith.constant 0 : index
    %87 = vector.load %arg1[%c1_149, %c1_150, %c20_151, %c0_152] : memref<2x3x24x24xf32, #tpu.memory_space<vmem>>, vector<1x1x4x24xf32>
    %88 = vector.shape_cast %87 : vector<1x1x4x24xf32> to vector<4x24xf32>
    %c4_153 = arith.constant 4 : index
    %c264_154 = arith.constant 264 : index
    %89 = vector.load %arg5[%c4_153, %c264_154] : memref<8x432xf32, #tpu.memory_space<vmem>>, vector<4x24xf32>
    tpu.vector_store %arg5[%c4_153, %c264_154], %88 {strides = array<i32>} : memref<8x432xf32, #tpu.memory_space<vmem>>, vector<4x24xf32>,
    %c1_155 = arith.constant 1 : index
    %c2_156 = arith.constant 2 : index
    %c0_157 = arith.constant 0 : index
    %c0_158 = arith.constant 0 : index
    %90 = vector.load %arg1[%c1_155, %c2_156, %c0_157, %c0_158] : memref<2x3x24x24xf32, #tpu.memory_space<vmem>>, vector<1x1x4x24xf32>
    %91 = vector.shape_cast %90 : vector<1x1x4x24xf32> to vector<4x24xf32>
    %c4_159 = arith.constant 4 : index
    %c288_160 = arith.constant 288 : index
    %92 = vector.load %arg5[%c4_159, %c288_160] : memref<8x432xf32, #tpu.memory_space<vmem>>, vector<4x24xf32>
    tpu.vector_store %arg5[%c4_159, %c288_160], %91 {strides = array<i32>} : memref<8x432xf32, #tpu.memory_space<vmem>>, vector<4x24xf32>,
    %c1_161 = arith.constant 1 : index
    %c2_162 = arith.constant 2 : index
    %c4_163 = arith.constant 4 : index
    %c0_164 = arith.constant 0 : index
    %93 = vector.load %arg1[%c1_161, %c2_162, %c4_163, %c0_164] : memref<2x3x24x24xf32, #tpu.memory_space<vmem>>, vector<1x1x4x24xf32>
    %94 = vector.shape_cast %93 : vector<1x1x4x24xf32> to vector<4x24xf32>
    %c4_165 = arith.constant 4 : index
    %c312_166 = arith.constant 312 : index
    %95 = vector.load %arg5[%c4_165, %c312_166] : memref<8x432xf32, #tpu.memory_space<vmem>>, vector<4x24xf32>
    tpu.vector_store %arg5[%c4_165, %c312_166], %94 {strides = array<i32>} : memref<8x432xf32, #tpu.memory_space<vmem>>, vector<4x24xf32>,
    %c1_167 = arith.constant 1 : index
    %c2_168 = arith.constant 2 : index
    %c8_169 = arith.constant 8 : index
    %c0_170 = arith.constant 0 : index
    %96 = vector.load %arg1[%c1_167, %c2_168, %c8_169, %c0_170] : memref<2x3x24x24xf32, #tpu.memory_space<vmem>>, vector<1x1x4x24xf32>
    %97 = vector.shape_cast %96 : vector<1x1x4x24xf32> to vector<4x24xf32>
    %c4_171 = arith.constant 4 : index
    %c336_172 = arith.constant 336 : index
    %98 = vector.load %arg5[%c4_171, %c336_172] : memref<8x432xf32, #tpu.memory_space<vmem>>, vector<4x24xf32>
    tpu.vector_store %arg5[%c4_171, %c336_172], %97 {strides = array<i32>} : memref<8x432xf32, #tpu.memory_space<vmem>>, vector<4x24xf32>,
    %c1_173 = arith.constant 1 : index
    %c2_174 = arith.constant 2 : index
    %c12_175 = arith.constant 12 : index
    %c0_176 = arith.constant 0 : index
    %99 = vector.load %arg1[%c1_173, %c2_174, %c12_175, %c0_176] : memref<2x3x24x24xf32, #tpu.memory_space<vmem>>, vector<1x1x4x24xf32>
    %100 = vector.shape_cast %99 : vector<1x1x4x24xf32> to vector<4x24xf32>
    %c4_177 = arith.constant 4 : index
    %c360_178 = arith.constant 360 : index
    %101 = vector.load %arg5[%c4_177, %c360_178] : memref<8x432xf32, #tpu.memory_space<vmem>>, vector<4x24xf32>
    tpu.vector_store %arg5[%c4_177, %c360_178], %100 {strides = array<i32>} : memref<8x432xf32, #tpu.memory_space<vmem>>, vector<4x24xf32>,
    %c1_179 = arith.constant 1 : index
    %c2_180 = arith.constant 2 : index
    %c16_181 = arith.constant 16 : index
    %c0_182 = arith.constant 0 : index
    %102 = vector.load %arg1[%c1_179, %c2_180, %c16_181, %c0_182] : memref<2x3x24x24xf32, #tpu.memory_space<vmem>>, vector<1x1x4x24xf32>
    %103 = vector.shape_cast %102 : vector<1x1x4x24xf32> to vector<4x24xf32>
    %c4_183 = arith.constant 4 : index
    %c384_184 = arith.constant 384 : index
    %104 = vector.load %arg5[%c4_183, %c384_184] : memref<8x432xf32, #tpu.memory_space<vmem>>, vector<4x24xf32>
    tpu.vector_store %arg5[%c4_183, %c384_184], %103 {strides = array<i32>} : memref<8x432xf32, #tpu.memory_space<vmem>>, vector<4x24xf32>,
    %c1_185 = arith.constant 1 : index
    %c2_186 = arith.constant 2 : index
    %c20_187 = arith.constant 20 : index
    %c0_188 = arith.constant 0 : index
    %105 = vector.load %arg1[%c1_185, %c2_186, %c20_187, %c0_188] : memref<2x3x24x24xf32, #tpu.memory_space<vmem>>, vector<1x1x4x24xf32>
    %106 = vector.shape_cast %105 : vector<1x1x4x24xf32> to vector<4x24xf32>
    %c4_189 = arith.constant 4 : index
    %c408_190 = arith.constant 408 : index
    %107 = vector.load %arg5[%c4_189, %c408_190] : memref<8x432xf32, #tpu.memory_space<vmem>>, vector<4x24xf32>
    tpu.vector_store %arg5[%c4_189, %c408_190], %106 {strides = array<i32>} : memref<8x432xf32, #tpu.memory_space<vmem>>, vector<4x24xf32>,
    %c0_191 = arith.constant 0 : index
    %c0_192 = arith.constant 0 : index
    %108 = vector.load %arg5[%c0_191, %c0_192] : memref<8x432xf32, #tpu.memory_space<vmem>>, vector<8x432xf32>
    %c0_193 = arith.constant 0 : index
    %c0_194 = arith.constant 0 : index
    %109 = vector.load %arg2[%c0_193, %c0_194] : memref<432x256xf32, #tpu.memory_space<vmem>>, vector<432x256xf32>
    %cst = arith.constant dense<0.000000e+00> : vector<8x256xf32>
    %110 = tpu.matmul %108, %109, %cst {dimension_numbers = #tpu.dot_dimension_numbers<[1], [0], [0], [1], [0, 0, 1, 1], [], []>} : vector<8x432xf32>, vector<432x256xf32>, vector<8x256xf32> -> vector<8x256xf32>
    %c0_195 = arith.constant 0 : index
    %c0_196 = arith.constant 0 : index
    %111 = vector.load %arg3[%c0_195, %c0_196] : memref<8x256xf32, #tpu.memory_space<vmem>>, vector<8x256xf32>
    %112 = arith.addf %110, %111 : vector<8x256xf32>
    %c0_197 = arith.constant 0 : index
    %c0_198 = arith.constant 0 : index
    %113 = vector.load %arg4[%c0_197, %c0_198] : memref<8x256xf32, #tpu.memory_space<vmem>>, vector<8x256xf32>
    tpu.vector_store %arg4[%c0_197, %c0_198], %112 {strides = array<i32>} : memref<8x256xf32, #tpu.memory_space<vmem>>, vector<8x256xf32>,
    return
  }
  func.func @transform_0(%arg0: i32) -> (i32, i32, i32, i32) {
    %c0_i32 = arith.constant 0 : i32
    %c0_i32_0 = arith.constant 0 : i32
    %c0_i32_1 = arith.constant 0 : i32
    %c0_i32_2 = arith.constant 0 : i32
    return %arg0, %c0_i32, %c0_i32_0, %c0_i32_1 : i32, i32, i32, i32
  }
  func.func @transform_1(%arg0: i32) -> (i32, i32) {
    %c0_i32 = arith.constant 0 : i32
    %c0_i32_0 = arith.constant 0 : i32
    %c0_i32_1 = arith.constant 0 : i32
    return %c0_i32, %c0_i32_0 : i32, i32
  }
  func.func @transform_2(%arg0: i32) -> (i32, i32) {
    %c0_i32 = arith.constant 0 : i32
    %c0_i32_0 = arith.constant 0 : i32
    %c0_i32_1 = arith.constant 0 : i32
    return %c0_i32, %c0_i32_0 : i32, i32
  }
  func.func @transform_3(%arg0: i32) -> (i32, i32) {
    %c0_i32 = arith.constant 0 : i32
    %c0_i32_0 = arith.constant 0 : i32
    return %arg0, %c0_i32 : i32, i32
  }
}

</mosaic_0001>

<llo_original>
// kernel: tpu_custom_call.1
$region0: #{tpu_custom_call.1}
  #allocation0 [shape = 'u32[]', space=smem, size = 0x4, offset = 0x4, fixed_abs, tag = 'smem constant byte address 0x4 - core index']
  #allocation1 [shape = 'u32[144,128]{1,0:T(1,128)}', space=vmem, size = 0x12000, scoped, tag = 'internal scratch']
  #allocation2 [shape = 'f32[8,432]{1,0:T(8,128)}', space=vmem, size = 0x4000, scoped, tag = 'scratch operand']
  %s0 = inlined_call_operand.hbm [shape: f32[2,3,24,24], index: 0, kind: input, shape index: {}]
  %s1 = inlined_call_operand.hbm [shape: f32[432,256], index: 1, kind: input, shape index: {}]
  %s2 = inlined_call_operand.hbm [shape: f32[8,256], index: 2, kind: input, shape index: {}]
  %s3 = inlined_call_operand.hbm [shape: f32[8,256], index: 3, kind: output, shape index: {}]
  %s4 = sld [smem:[#allocation0]]
  $region34: #{tpu_custom_call.1} parent=0
    _
  %s6 = ssub.s32 1, %s4
  %s7 = scalar_select 0, %s6, %s4
  $region1: #{tpu_custom_call.1} parent=0
    #allocation3 [shape = 'u8[73728]{0}', space=vmem, size = 0x12000, scoped, tag = 'input window, operand 0, single buffered']
    #allocation4 [shape = 's32[1]{0}', space=sflag, size = 0x4, scoped, tag = 'scoped memory for tpu_custom_call.1']
    #allocation5 [shape = 's32[1]{0}', space=sflag, size = 0x4, scoped, tag = 'scoped memory for tpu_custom_call.1']
    #allocation6 [shape = 'u8[442368]{0}', space=vmem, size = 0x6c000, scoped, tag = 'input window, operand 1, single buffered']
    #allocation7 [shape = 's32[1]{0}', space=sflag, size = 0x4, scoped, tag = 'scoped memory for tpu_custom_call.1']
    #allocation8 [shape = 'u8[8192]{0}', space=vmem, size = 0x2000, scoped, tag = 'input window, operand 2, single buffered']
    #allocation9 [shape = 'u8[8192]{0}', space=vmem, size = 0x2000, scoped, tag = 'output window, operand 0, single buffered']
    %8 = vsyncpa [#allocation4], 0
    %9 = vsyncpa [#allocation7], 0
    %10 = vsyncpa [#allocation5], 0
    // Predicated region
    $region2: #{tpu_custom_call.1} parent=1 // pred_check
      _
    $region3: #{tpu_custom_call.1} parent=1 // pred_check_branch
      %12 = sbr.rel (0) target = $region5
    $region4: #{tpu_custom_call.1} parent=1 // pred_region
      %s14 = ssub.s32 2304, 2304
      %15 = vsyncadd [#allocation4], %s14
      %s16 = sshll.u32 [#allocation3], 4
      %s17 = int_to_ptr.vmem [resolvable:$true] %s16
      %22 = dma.hbm_to_vmem [thread:$0]  %s0, 2304, %s17, [#allocation4], 128, 128, 8
    $region5: #{tpu_custom_call.1} parent=1 // pred_fallthru
      _
    // Predicated region
    $region6: #{tpu_custom_call.1} parent=1 // pred_check
      _
    $region7: #{tpu_custom_call.1} parent=1 // pred_check_branch
      %24 = sbr.rel (0) target = $region9
    $region8: #{tpu_custom_call.1} parent=1 // pred_region
      %s26 = ssub.s32 13824, 13824
      %27 = vsyncadd [#allocation7], %s26
      %s28 = sshll.u32 [#allocation6], 4
      %s29 = int_to_ptr.vmem [resolvable:$true] %s28
      %34 = dma.hbm_to_vmem [thread:$0]  %s1, 13824, %s29, [#allocation7], 256, 256, 16
    $region9: #{tpu_custom_call.1} parent=1 // pred_fallthru
      _
    // Predicated region
    $region10: #{tpu_custom_call.1} parent=1 // pred_check
      _
    $region11: #{tpu_custom_call.1} parent=1 // pred_check_branch
      %36 = sbr.rel (0) target = $region13
    $region12: #{tpu_custom_call.1} parent=1 // pred_region
      %s38 = ssub.s32 256, 256
      %39 = vsyncadd [#allocation7], %s38
      %s41 = sshll.u32 [#allocation8], 4
      %s42 = int_to_ptr.vmem [resolvable:$true] %s41
      %44 = dma.hbm_to_vmem [thread:$0]  %s2, 256, %s42, [#allocation7]
    $region13: #{tpu_custom_call.1} parent=1 // pred_fallthru
      _
    // Predicated region
    $region14: #{tpu_custom_call.1} parent=1 // pred_check
      _
    $region15: #{tpu_custom_call.1} parent=1 // pred_check_branch
      %46 = sbr.rel (0) target = $region17
    $region16: #{tpu_custom_call.1} parent=1 // pred_region
      %47 = dma.done [#allocation4], 2304
    $region17: #{tpu_custom_call.1} parent=1 // pred_fallthru
      _
    // Predicated region
    $region18: #{tpu_custom_call.1} parent=1 // pred_check
      _
    $region19: #{tpu_custom_call.1} parent=1 // pred_check_branch
      %49 = sbr.rel (0) target = $region21
    $region20: #{tpu_custom_call.1} parent=1 // pred_region
      %50 = dma.done [#allocation7], 13824
    $region21: #{tpu_custom_call.1} parent=1 // pred_fallthru
      _
    // Predicated region
    $region22: #{tpu_custom_call.1} parent=1 // pred_check
      _
    $region23: #{tpu_custom_call.1} parent=1 // pred_check_branch
      %52 = sbr.rel (0) target = $region25
    $region24: #{tpu_custom_call.1} parent=1 // pred_region
      %53 = dma.done [#allocation7], 256
    $region25: #{tpu_custom_call.1} parent=1 // pred_fallthru
      _
    %v54 = vld [vmem:[#allocation3] sm:$0xf]
    %vm55 = vcmask 191488
    %56 = vst.msk [vmem:[#allocation2] sm:$0xf] %vm55, %v54
    %v57 = vld [vmem:[#allocation3 + $0x4] sm:$0xf]
    %59 = vrot.lane.b32.xlu0 %v57, 24
    %v60 = vpop.permute.xlu0 %59
    %vm62 = vcmask 388288
    %63 = vst.msk [vmem:[#allocation2] sm:$0xf] %vm62, %v60
    %v64 = vld [vmem:[#allocation3 + $0x8] sm:$0xf]
    %66 = vrot.lane.b32.xlu0 %v64, 48
    %v67 = vpop.permute.xlu0 %66
    %vm69 = vcmask 585088
    %70 = vst.msk [vmem:[#allocation2] sm:$0xf] %vm69, %v67
    %v71 = vld [vmem:[#allocation3 + $0xc] sm:$0xf]
    %73 = vrot.lane.b32.xlu0 %v71, 72
    %v74 = vpop.permute.xlu0 %73
    %vm76 = vcmask 781888
    %77 = vst.msk [vmem:[#allocation2] sm:$0xf] %vm76, %v74
    %v78 = vld [vmem:[#allocation3 + $0x10] sm:$0xf]
    %80 = vrot.lane.b32.xlu0 %v78, 96
    %v81 = vpop.permute.xlu0 %80
    %vm83 = vcmask 978688
    %84 = vst.msk [vmem:[#allocation2] sm:$0xf] %vm83, %v81
    %v85 = vld [vmem:[#allocation3 + $0x14] sm:$0xf]
    %87 = vrot.lane.b32.xlu0 %v85, 120
    %v88 = vpop.permute.xlu0 %87
    %vm90 = vcmask 1044416
    %91 = vst.msk [vmem:[#allocation2] sm:$0xf] %vm90, %v88
    %vm92 = vcmask 125952
    %93 = vst.msk [vmem:[#allocation2 + $0x8] sm:$0xf] %vm92, %v88
    %s94 = scalar_lea.vmem [#allocation3], 24
    %v95 = vld [vmem:[%s94] sm:$0xf]
    %97 = vrot.lane.b32.xlu0 %v95, 16
    %v98 = vpop.permute.xlu0 %97
    %vm100 = vcmask 322688
    %101 = vst.msk [vmem:[#allocation2 + $0x8] sm:$0xf] %vm100, %v98
    %v102 = vld [vmem:[%s94 + $0x4] sm:$0xf]
    %104 = vrot.lane.b32.xlu0 %v102, 40
    %v105 = vpop.permute.xlu0 %104
    %vm107 = vcmask 519488
    %108 = vst.msk [vmem:[#allocation2 + $0x8] sm:$0xf] %vm107, %v105
    %v109 = vld [vmem:[%s94 + $0x8] sm:$0xf]
    %111 = vrot.lane.b32.xlu0 %v109, 64
    %v112 = vpop.permute.xlu0 %111
    %vm114 = vcmask 716288
    %115 = vst.msk [vmem:[#allocation2 + $0x8] sm:$0xf] %vm114, %v112
    %v116 = vld [vmem:[%s94 + $0xc] sm:$0xf]
    %118 = vrot.lane.b32.xlu0 %v116, 88
    %v119 = vpop.permute.xlu0 %118
    %vm121 = vcmask 913088
    %122 = vst.msk [vmem:[#allocation2 + $0x8] sm:$0xf] %vm121, %v119
    %v123 = vld [vmem:[%s94 + $0x10] sm:$0xf]
    %125 = vrot.lane.b32.xlu0 %v123, 112
    %v126 = vpop.permute.xlu0 %125
    %vm128 = vcmask 1044352
    %129 = vst.msk [vmem:[#allocation2 + $0x8] sm:$0xf] %vm128, %v126
    %vm130 = vcmask 60416
    %131 = vst.msk [vmem:[#allocation2 + $0x10] sm:$0xf] %vm130, %v126
    %v132 = vld [vmem:[%s94 + $0x14] sm:$0xf]
    %134 = vrot.lane.b32.xlu0 %v132, 8
    %v135 = vpop.permute.xlu0 %134
    %vm137 = vcmask 257088
    %138 = vst.msk [vmem:[#allocation2 + $0x10] sm:$0xf] %vm137, %v135
    %s139 = scalar_lea.vmem [#allocation3], 48
    %v140 = vld [vmem:[%s139] sm:$0xf]
    %142 = vrot.lane.b32.xlu0 %v140, 32
    %v143 = vpop.permute.xlu0 %142
    %vm145 = vcmask 453888
    %146 = vst.msk [vmem:[#allocation2 + $0x10] sm:$0xf] %vm145, %v143
    %v147 = vld [vmem:[%s139 + $0x4] sm:$0xf]
    %149 = vrot.lane.b32.xlu0 %v147, 56
    %v150 = vpop.permute.xlu0 %149
    %vm152 = vcmask 650688
    %153 = vst.msk [vmem:[#allocation2 + $0x10] sm:$0xf] %vm152, %v150
    %v154 = vld [vmem:[%s139 + $0x8] sm:$0xf]
    %156 = vrot.lane.b32.xlu0 %v154, 80
    %v157 = vpop.permute.xlu0 %156
    %vm159 = vcmask 847488
    %160 = vst.msk [vmem:[#allocation2 + $0x10] sm:$0xf] %vm159, %v157
    %v161 = vld [vmem:[%s139 + $0xc] sm:$0xf]
    %163 = vrot.lane.b32.xlu0 %v161, 104
    %v164 = vpop.permute.xlu0 %163
    %vm166 = vcmask 1044288
    %167 = vst.msk [vmem:[#allocation2 + $0x10] sm:$0xf] %vm166, %v164
    %v168 = vld [vmem:[%s139 + $0x10] sm:$0xf]
    %169 = vst.msk [vmem:[#allocation2 + $0x18] sm:$0xf] %vm55, %v168
    %v170 = vld [vmem:[%s139 + $0x14] sm:$0xf]
    %172 = vrot.lane.b32.xlu0 %v170, 24
    %v173 = vpop.permute.xlu0 %172
    %175 = vst.msk [vmem:[#allocation2 + $0x18] sm:$0xf] %vm62, %v173
    %s176 = scalar_lea.vmem [#allocation3], 72
    %v177 = vld [vmem:[%s176] sm:$0xf]
    %v179 = vrot.slane %v177, 4
    %vm181 = vcmask 195588
    %182 = vst.msk [vmem:[#allocation2] sm:$0xf0] %vm181, %v179
    %v183 = vld [vmem:[%s176 + $0x4] sm:$0xf]
    %v185 = vrot.slane %v183, 4
    %186 = vrot.lane.b32.xlu0 %v185, 24
    %v187 = vpop.permute.xlu0 %186
    %vm189 = vcmask 392388
    %190 = vst.msk [vmem:[#allocation2] sm:$0xf0] %vm189, %v187
    %v191 = vld [vmem:[%s176 + $0x8] sm:$0xf]
    %v193 = vrot.slane %v191, 4
    %194 = vrot.lane.b32.xlu0 %v193, 48
    %v195 = vpop.permute.xlu0 %194
    %vm197 = vcmask 589188
    %198 = vst.msk [vmem:[#allocation2] sm:$0xf0] %vm197, %v195
    %v199 = vld [vmem:[%s176 + $0xc] sm:$0xf]
    %v201 = vrot.slane %v199, 4
    %202 = vrot.lane.b32.xlu0 %v201, 72
    %v203 = vpop.permute.xlu0 %202
    %vm205 = vcmask 785988
    %206 = vst.msk [vmem:[#allocation2] sm:$0xf0] %vm205, %v203
    %v207 = vld [vmem:[%s176 + $0x10] sm:$0xf]
    %v209 = vrot.slane %v207, 4
    %210 = vrot.lane.b32.xlu0 %v209, 96
    %v211 = vpop.permute.xlu0 %210
    %vm213 = vcmask 982788
    %214 = vst.msk [vmem:[#allocation2] sm:$0xf0] %vm213, %v211
    %v215 = vld [vmem:[%s176 + $0x14] sm:$0xf]
    %v217 = vrot.slane %v215, 4
    %218 = vrot.lane.b32.xlu0 %v217, 120
    %v219 = vpop.permute.xlu0 %218
    %vm221 = vcmask 1048516
    %222 = vst.msk [vmem:[#allocation2] sm:$0xf0] %vm221, %v219
    %vm223 = vcmask 130052
    %224 = vst.msk [vmem:[#allocation2 + $0x8] sm:$0xf0] %vm223, %v219
    %s225 = scalar_lea.vmem [#allocation3], 96
    %v226 = vld [vmem:[%s225] sm:$0xf]
    %v228 = vrot.slane %v226, 4
    %229 = vrot.lane.b32.xlu0 %v228, 16
    %v230 = vpop.permute.xlu0 %229
    %vm232 = vcmask 326788
    %233 = vst.msk [vmem:[#allocation2 + $0x8] sm:$0xf0] %vm232, %v230
    %v234 = vld [vmem:[%s225 + $0x4] sm:$0xf]
    %v236 = vrot.slane %v234, 4
    %237 = vrot.lane.b32.xlu0 %v236, 40
    %v238 = vpop.permute.xlu0 %237
    %vm240 = vcmask 523588
    %241 = vst.msk [vmem:[#allocation2 + $0x8] sm:$0xf0] %vm240, %v238
    %v242 = vld [vmem:[%s225 + $0x8] sm:$0xf]
    %v244 = vrot.slane %v242, 4
    %245 = vrot.lane.b32.xlu0 %v244, 64
    %v246 = vpop.permute.xlu0 %245
    %vm248 = vcmask 720388
    %249 = vst.msk [vmem:[#allocation2 + $0x8] sm:$0xf0] %vm248, %v246
    %v250 = vld [vmem:[%s225 + $0xc] sm:$0xf]
    %v252 = vrot.slane %v250, 4
    %253 = vrot.lane.b32.xlu0 %v252, 88
    %v254 = vpop.permute.xlu0 %253
    %vm256 = vcmask 917188
    %257 = vst.msk [vmem:[#allocation2 + $0x8] sm:$0xf0] %vm256, %v254
    %v258 = vld [vmem:[%s225 + $0x10] sm:$0xf]
    %v260 = vrot.slane %v258, 4
    %261 = vrot.lane.b32.xlu0 %v260, 112
    %v262 = vpop.permute.xlu0 %261
    %vm264 = vcmask 1048452
    %265 = vst.msk [vmem:[#allocation2 + $0x8] sm:$0xf0] %vm264, %v262
    %vm266 = vcmask 64516
    %267 = vst.msk [vmem:[#allocation2 + $0x10] sm:$0xf0] %vm266, %v262
    %v268 = vld [vmem:[%s225 + $0x14] sm:$0xf]
    %v270 = vrot.slane %v268, 4
    %271 = vrot.lane.b32.xlu0 %v270, 8
    %v272 = vpop.permute.xlu0 %271
    %vm274 = vcmask 261188
    %275 = vst.msk [vmem:[#allocation2 + $0x10] sm:$0xf0] %vm274, %v272
    %s276 = scalar_lea.vmem [#allocation3], 120
    %v277 = vld [vmem:[%s276] sm:$0xf]
    %v279 = vrot.slane %v277, 4
    %280 = vrot.lane.b32.xlu0 %v279, 32
    %v281 = vpop.permute.xlu0 %280
    %vm283 = vcmask 457988
    %284 = vst.msk [vmem:[#allocation2 + $0x10] sm:$0xf0] %vm283, %v281
    %v285 = vld [vmem:[%s276 + $0x4] sm:$0xf]
    %v287 = vrot.slane %v285, 4
    %288 = vrot.lane.b32.xlu0 %v287, 56
    %v289 = vpop.permute.xlu0 %288
    %vm291 = vcmask 654788
    %292 = vst.msk [vmem:[#allocation2 + $0x10] sm:$0xf0] %vm291, %v289
    %v293 = vld [vmem:[%s276 + $0x8] sm:$0xf]
    %v295 = vrot.slane %v293, 4
    %296 = vrot.lane.b32.xlu0 %v295, 80
    %v297 = vpop.permute.xlu0 %296
    %vm299 = vcmask 851588
    %300 = vst.msk [vmem:[#allocation2 + $0x10] sm:$0xf0] %vm299, %v297
    %v301 = vld [vmem:[%s276 + $0xc] sm:$0xf]
    %v303 = vrot.slane %v301, 4
    %304 = vrot.lane.b32.xlu0 %v303, 104
    %v305 = vpop.permute.xlu0 %304
    %vm307 = vcmask 1048388
    %308 = vst.msk [vmem:[#allocation2 + $0x10] sm:$0xf0] %vm307, %v305
    %v309 = vld [vmem:[%s276 + $0x10] sm:$0xf]
    %v311 = vrot.slane %v309, 4
    %313 = vst.msk [vmem:[#allocation2 + $0x18] sm:$0xf0] %vm181, %v311
    %v314 = vld [vmem:[%s276 + $0x14] sm:$0xf]
    %v316 = vrot.slane %v314, 4
    %317 = vrot.lane.b32.xlu0 %v316, 24
    %v318 = vpop.permute.xlu0 %317
    %320 = vst.msk [vmem:[#allocation2 + $0x18] sm:$0xf0] %vm189, %v318
    %v321 = vld [vmem:[#allocation2] sm:$0xff]
    %v322 = vld [vmem:[#allocation2 + $0x8] sm:$0xff]
    %v323 = vld [vmem:[#allocation2 + $0x10] sm:$0xff]
    %v324 = vld [vmem:[#allocation2 + $0x18] sm:$0xff]
    %v325 = vld [vmem:[#allocation6] sm:$0xff]
    %v326 = vld [vmem:[#allocation6 + $0x8] sm:$0xff]
    %v327 = vld [vmem:[#allocation6 + $0x10] sm:$0xff]
    %v328 = vld [vmem:[#allocation6 + $0x18] sm:$0xff]
    %v329 = vld [vmem:[#allocation6 + $0x20] sm:$0xff]
    %v330 = vld [vmem:[#allocation6 + $0x28] sm:$0xff]
    %v331 = vld [vmem:[#allocation6 + $0x30] sm:$0xff]
    %v332 = vld [vmem:[#allocation6 + $0x38] sm:$0xff]
    %v333 = vld [vmem:[#allocation6 + $0x40] sm:$0xff]
    %v334 = vld [vmem:[#allocation6 + $0x48] sm:$0xff]
    %v335 = vld [vmem:[#allocation6 + $0x50] sm:$0xff]
    %v336 = vld [vmem:[#allocation6 + $0x58] sm:$0xff]
    %v337 = vld [vmem:[#allocation6 + $0x60] sm:$0xff]
    %v338 = vld [vmem:[#allocation6 + $0x68] sm:$0xff]
    %v339 = vld [vmem:[#allocation6 + $0x70] sm:$0xff]
    %v340 = vld [vmem:[#allocation6 + $0x78] sm:$0xff]
    %v341 = vld [vmem:[#allocation6 + $0x80] sm:$0xff]
    %v342 = vld [vmem:[#allocation6 + $0x88] sm:$0xff]
    %v343 = vld [vmem:[#allocation6 + $0x90] sm:$0xff]
    %v344 = vld [vmem:[#allocation6 + $0x98] sm:$0xff]
    %v345 = vld [vmem:[#allocation6 + $0xa0] sm:$0xff]
    %v346 = vld [vmem:[#allocation6 + $0xa8] sm:$0xff]
    %v347 = vld [vmem:[#allocation6 + $0xb0] sm:$0xff]
    %v348 = vld [vmem:[#allocation6 + $0xb8] sm:$0xff]
    %v349 = vld [vmem:[#allocation6 + $0xc0] sm:$0xff]
    %v350 = vld [vmem:[#allocation6 + $0xc8] sm:$0xff]
    %v351 = vld [vmem:[#allocation6 + $0xd0] sm:$0xff]
    %v352 = vld [vmem:[#allocation6 + $0xd8] sm:$0xff]
    %v353 = vld [vmem:[#allocation6 + $0xe0] sm:$0xff]
    %v354 = vld [vmem:[#allocation6 + $0xe8] sm:$0xff]
    %v355 = vld [vmem:[#allocation6 + $0xf0] sm:$0xff]
    %v356 = vld [vmem:[#allocation6 + $0xf8] sm:$0xff]
    %v357 = vld [vmem:[#allocation6 + $0x100] sm:$0xff]
    %v358 = vld [vmem:[#allocation6 + $0x108] sm:$0xff]
    %v359 = vld [vmem:[#allocation6 + $0x110] sm:$0xff]
    %v360 = vld [vmem:[#allocation6 + $0x118] sm:$0xff]
    %v361 = vld [vmem:[#allocation6 + $0x120] sm:$0xff]
    %v362 = vld [vmem:[#allocation6 + $0x128] sm:$0xff]
    %v363 = vld [vmem:[#allocation6 + $0x130] sm:$0xff]
    %v364 = vld [vmem:[#allocation6 + $0x138] sm:$0xff]
    %v365 = vld [vmem:[#allocation6 + $0x140] sm:$0xff]
    %v366 = vld [vmem:[#allocation6 + $0x148] sm:$0xff]
    %v367 = vld [vmem:[#allocation6 + $0x150] sm:$0xff]
    %v368 = vld [vmem:[#allocation6 + $0x158] sm:$0xff]
    %v369 = vld [vmem:[#allocation6 + $0x160] sm:$0xff]
    %v370 = vld [vmem:[#allocation6 + $0x168] sm:$0xff]
    %v371 = vld [vmem:[#allocation6 + $0x170] sm:$0xff]
    %v372 = vld [vmem:[#allocation6 + $0x178] sm:$0xff]
    %v373 = vld [vmem:[#allocation6 + $0x180] sm:$0xff]
    %v374 = vld [vmem:[#allocation6 + $0x188] sm:$0xff]
    %v375 = vld [vmem:[#allocation6 + $0x190] sm:$0xff]
    %v376 = vld [vmem:[#allocation6 + $0x198] sm:$0xff]
    %v377 = vld [vmem:[#allocation6 + $0x1a0] sm:$0xff]
    %v378 = vld [vmem:[#allocation6 + $0x1a8] sm:$0xff]
    %v379 = vld [vmem:[#allocation6 + $0x1b0] sm:$0xff]
    %v380 = vld [vmem:[#allocation6 + $0x1b8] sm:$0xff]
    %v381 = vld [vmem:[#allocation6 + $0x1c0] sm:$0xff]
    %v382 = vld [vmem:[#allocation6 + $0x1c8] sm:$0xff]
    %v383 = vld [vmem:[#allocation6 + $0x1d0] sm:$0xff]
    %v384 = vld [vmem:[#allocation6 + $0x1d8] sm:$0xff]
    %v385 = vld [vmem:[#allocation6 + $0x1e0] sm:$0xff]
    %v386 = vld [vmem:[#allocation6 + $0x1e8] sm:$0xff]
    %v387 = vld [vmem:[#allocation6 + $0x1f0] sm:$0xff]
    %v388 = vld [vmem:[#allocation6 + $0x1f8] sm:$0xff]
    %v389 = vld [vmem:[#allocation6 + $0x200] sm:$0xff]
    %v390 = vld [vmem:[#allocation6 + $0x208] sm:$0xff]
    %v391 = vld [vmem:[#allocation6 + $0x210] sm:$0xff]
    %v392 = vld [vmem:[#allocation6 + $0x218] sm:$0xff]
    %v393 = vld [vmem:[#allocation6 + $0x220] sm:$0xff]
    %v394 = vld [vmem:[#allocation6 + $0x228] sm:$0xff]
    %v395 = vld [vmem:[#allocation6 + $0x230] sm:$0xff]
    %v396 = vld [vmem:[#allocation6 + $0x238] sm:$0xff]
    %v397 = vld [vmem:[#allocation6 + $0x240] sm:$0xff]
    %v398 = vld [vmem:[#allocation6 + $0x248] sm:$0xff]
    %v399 = vld [vmem:[#allocation6 + $0x250] sm:$0xff]
    %v400 = vld [vmem:[#allocation6 + $0x258] sm:$0xff]
    %v401 = vld [vmem:[#allocation6 + $0x260] sm:$0xff]
    %v402 = vld [vmem:[#allocation6 + $0x268] sm:$0xff]
    %v403 = vld [vmem:[#allocation6 + $0x270] sm:$0xff]
    %v404 = vld [vmem:[#allocation6 + $0x278] sm:$0xff]
    %v405 = vld [vmem:[#allocation6 + $0x280] sm:$0xff]
    %v406 = vld [vmem:[#allocation6 + $0x288] sm:$0xff]
    %v407 = vld [vmem:[#allocation6 + $0x290] sm:$0xff]
    %v408 = vld [vmem:[#allocation6 + $0x298] sm:$0xff]
    %v409 = vld [vmem:[#allocation6 + $0x2a0] sm:$0xff]
    %v410 = vld [vmem:[#allocation6 + $0x2a8] sm:$0xff]
    %v411 = vld [vmem:[#allocation6 + $0x2b0] sm:$0xff]
    %v412 = vld [vmem:[#allocation6 + $0x2b8] sm:$0xff]
    %v413 = vld [vmem:[#allocation6 + $0x2c0] sm:$0xff]
    %v414 = vld [vmem:[#allocation6 + $0x2c8] sm:$0xff]
    %v415 = vld [vmem:[#allocation6 + $0x2d0] sm:$0xff]
    %v416 = vld [vmem:[#allocation6 + $0x2d8] sm:$0xff]
    %v417 = vld [vmem:[#allocation6 + $0x2e0] sm:$0xff]
    %v418 = vld [vmem:[#allocation6 + $0x2e8] sm:$0xff]
    %v419 = vld [vmem:[#allocation6 + $0x2f0] sm:$0xff]
    %v420 = vld [vmem:[#allocation6 + $0x2f8] sm:$0xff]
    %v421 = vld [vmem:[#allocation6 + $0x300] sm:$0xff]
    %v422 = vld [vmem:[#allocation6 + $0x308] sm:$0xff]
    %v423 = vld [vmem:[#allocation6 + $0x310] sm:$0xff]
    %v424 = vld [vmem:[#allocation6 + $0x318] sm:$0xff]
    %v425 = vld [vmem:[#allocation6 + $0x320] sm:$0xff]
    %v426 = vld [vmem:[#allocation6 + $0x328] sm:$0xff]
    %v427 = vld [vmem:[#allocation6 + $0x330] sm:$0xff]
    %v428 = vld [vmem:[#allocation6 + $0x338] sm:$0xff]
    %v429 = vld [vmem:[#allocation6 + $0x340] sm:$0xff]
    %v430 = vld [vmem:[#allocation6 + $0x348] sm:$0xff]
    %v431 = vld [vmem:[#allocation6 + $0x350] sm:$0xff]
    %v432 = vld [vmem:[#allocation6 + $0x358] sm:$0xff]
    %v433 = vld [vmem:[#allocation8] sm:$0xff]
    %v434 = vld [vmem:[#allocation8 + $0x8] sm:$0xff]
    %vm435 = vcmask 392192
    %v437 = vsel %vm435, %v324, 0
    %439 = vmatprep.subr.mxu0 %v356
    %440 = vmatpush1.msra.mxu0 %v355
    %441 = vmatprep.subr.mxu0 %v354
    %442 = vmatpush1.msra.mxu0 %v353
    %443 = vmatprep.subr.mxu0 %v352
    %444 = vmatpush1.msra.mxu0 %v351
    %445 = vmatprep.subr.mxu0 %v350
    %446 = vmatpush1.msra.mxu0 %v349
    %447 = vmatprep.subr.mxu0 %v348
    %448 = vmatpush1.msra.mxu0 %v347
    %449 = vmatprep.subr.mxu0 %v346
    %450 = vmatpush1.msra.mxu0 %v345
    %451 = vmatprep.subr.mxu0 %v344
    %452 = vmatpush1.msra.mxu0 %v343
    %453 = vmatprep.subr.mxu0 %v342
    %454 = vmatpush1.msra.mxu0 %v341
    %455 = vmatprep.subr.mxu0 %v340
    %456 = vmatpush1.msra.mxu0 %v339
    %457 = vmatprep.subr.mxu0 %v338
    %458 = vmatpush1.msra.mxu0 %v337
    %459 = vmatprep.subr.mxu0 %v336
    %460 = vmatpush1.msra.mxu0 %v335
    %461 = vmatprep.subr.mxu0 %v334
    %462 = vmatpush1.msra.mxu0 %v333
    %463 = vmatprep.subr.mxu0 %v332
    %464 = vmatpush1.msra.mxu0 %v331
    %465 = vmatprep.subr.mxu0 %v330
    %466 = vmatpush1.msra.mxu0 %v329
    %467 = vmatprep.subr.mxu0 %v328
    %468 = vmatpush1.msra.mxu0 %v327
    %469 = vmatprep.subr.mxu0 %v326
    %470 = vmatpush1.msra.mxu0 %v325
    %471 = vmatprep.subr.mxu0 %v388
    %472 = vmatpush2.msra.mxu0 %v387
    %473 = vmatprep.subr.mxu0 %v386
    %474 = vmatpush2.msra.mxu0 %v385
    %475 = vmatprep.subr.mxu0 %v384
    %476 = vmatpush2.msra.mxu0 %v383
    %477 = vmatprep.subr.mxu0 %v382
    %478 = vmatpush2.msra.mxu0 %v381
    %479 = vmatprep.subr.mxu0 %v380
    %480 = vmatpush2.msra.mxu0 %v379
    %481 = vmatprep.subr.mxu0 %v378
    %482 = vmatpush2.msra.mxu0 %v377
    %483 = vmatprep.subr.mxu0 %v376
    %484 = vmatpush2.msra.mxu0 %v375
    %485 = vmatprep.subr.mxu0 %v374
    %486 = vmatpush2.msra.mxu0 %v373
    %487 = vmatprep.subr.mxu0 %v372
    %488 = vmatpush2.msra.mxu0 %v371
    %489 = vmatprep.subr.mxu0 %v370
    %490 = vmatpush2.msra.mxu0 %v369
    %491 = vmatprep.subr.mxu0 %v368
    %492 = vmatpush2.msra.mxu0 %v367
    %493 = vmatprep.subr.mxu0 %v366
    %494 = vmatpush2.msra.mxu0 %v365
    %495 = vmatprep.subr.mxu0 %v364
    %496 = vmatpush2.msra.mxu0 %v363
    %497 = vmatprep.subr.mxu0 %v362
    %498 = vmatpush2.msra.mxu0 %v361
    %499 = vmatprep.subr.mxu0 %v360
    %500 = vmatpush2.msra.mxu0 %v359
    %501 = vmatprep.subr.mxu0 %v358
    %502 = vmatpush2.msra.mxu0 %v357
    %503 = vmatprep.mubr.f32.mxu0 %v322
    %504 = vmatmul.mubr.f32.gmra.mxu0 %v321
    %v505 = vpop.f32.mrf.mxu0
    %v506 = vadd.f32 %v433, %v505
    %v507 = vpop.f32.mrf.mxu0
    %v508 = vadd.f32 %v434, %v507
    %509 = vdwg.mxu0
    %510 = vmatprep.subr.mxu0 %v420
    %511 = vmatpush1.msra.mxu0 %v419
    %512 = vmatprep.subr.mxu0 %v418
    %513 = vmatpush1.msra.mxu0 %v417
    %514 = vmatprep.subr.mxu0 %v416
    %515 = vmatpush1.msra.mxu0 %v415
    %516 = vmatprep.subr.mxu0 %v414
    %517 = vmatpush1.msra.mxu0 %v413
    %518 = vmatprep.subr.mxu0 %v412
    %519 = vmatpush1.msra.mxu0 %v411
    %520 = vmatprep.subr.mxu0 %v410
    %521 = vmatpush1.msra.mxu0 %v409
    %522 = vmatprep.subr.mxu0 %v408
    %523 = vmatpush1.msra.mxu0 %v407
    %524 = vmatprep.subr.mxu0 %v406
    %525 = vmatpush1.msra.mxu0 %v405
    %526 = vmatprep.subr.mxu0 %v404
    %527 = vmatpush1.msra.mxu0 %v403
    %528 = vmatprep.subr.mxu0 %v402
    %529 = vmatpush1.msra.mxu0 %v401
    %530 = vmatprep.subr.mxu0 %v400
    %531 = vmatpush1.msra.mxu0 %v399
    %532 = vmatprep.subr.mxu0 %v398
    %533 = vmatpush1.msra.mxu0 %v397
    %534 = vmatprep.subr.mxu0 %v396
    %535 = vmatpush1.msra.mxu0 %v395
    %536 = vmatprep.subr.mxu0 %v394
    %537 = vmatpush1.msra.mxu0 %v393
    %538 = vmatprep.subr.mxu0 %v392
    %539 = vmatpush1.msra.mxu0 %v391
    %540 = vmatprep.subr.mxu0 %v390
    %541 = vmatpush1.msra.mxu0 %v389
    %542 = vmatprep.subr.mxu0 0.0
    %543 = vmatpush2.msra.mxu0 0.0
    %544 = vmatprep.subr.mxu0 0.0
    %545 = vmatpush2.msra.mxu0 0.0
    %546 = vmatprep.subr.mxu0 0.0
    %547 = vmatpush2.msra.mxu0 0.0
    %548 = vmatprep.subr.mxu0 0.0
    %549 = vmatpush2.msra.mxu0 0.0
    %550 = vmatprep.subr.mxu0 0.0
    %551 = vmatpush2.msra.mxu0 0.0
    %552 = vmatprep.subr.mxu0 0.0
    %553 = vmatpush2.msra.mxu0 0.0
    %554 = vmatprep.subr.mxu0 0.0
    %555 = vmatpush2.msra.mxu0 0.0
    %556 = vmatprep.subr.mxu0 0.0
    %557 = vmatpush2.msra.mxu0 0.0
    %558 = vmatprep.subr.mxu0 0.0
    %559 = vmatpush2.msra.mxu0 0.0
    %560 = vmatprep.subr.mxu0 0.0
    %561 = vmatpush2.msra.mxu0 0.0
    %562 = vmatprep.subr.mxu0 %v432
    %563 = vmatpush2.msra.mxu0 %v431
    %564 = vmatprep.subr.mxu0 %v430
    %565 = vmatpush2.msra.mxu0 %v429
    %566 = vmatprep.subr.mxu0 %v428
    %567 = vmatpush2.msra.mxu0 %v427
    %568 = vmatprep.subr.mxu0 %v426
    %569 = vmatpush2.msra.mxu0 %v425
    %570 = vmatprep.subr.mxu0 %v424
    %571 = vmatpush2.msra.mxu0 %v423
    %572 = vmatprep.subr.mxu0 %v422
    %573 = vmatpush2.msra.mxu0 %v421
    %574 = vmatprep.mubr.f32.mxu0 %v437
    %575 = vmatmul.mubr.f32.gmra.mxu0 %v323
    %v576 = vpop.f32.mrf.mxu0
    %v577 = vadd.f32 %v506, %v576
    %v578 = vpop.f32.mrf.mxu0
    %v579 = vadd.f32 %v508, %v578
    %580 = vdwg.mxu0
    %581 = vst [vmem:[#allocation9] sm:$0xff] %v577
    %582 = vst [vmem:[#allocation9 + $0x8] sm:$0xff] %v579
    // Predicated region
    $region26: #{tpu_custom_call.1} parent=1 // pred_check
      _
    $region27: #{tpu_custom_call.1} parent=1 // pred_check_branch
      %584 = sbr.rel (0) target = $region29
    $region28: #{tpu_custom_call.1} parent=1 // pred_region
      %s586 = ssub.s32 256, 256
      %587 = vsyncadd [#allocation5], %s586
      %s589 = sshll.u32 [#allocation9], 4
      %s590 = int_to_ptr.vmem [resolvable:$true] %s589
      %592 = dma.vmem_to_hbm [thread:$0]  %s590, 256, %s3, [#allocation5]
    $region29: #{tpu_custom_call.1} parent=1 // pred_fallthru
      _
    // Predicated region
    $region30: #{tpu_custom_call.1} parent=1 // pred_check
      _
    $region31: #{tpu_custom_call.1} parent=1 // pred_check_branch
      %594 = sbr.rel (0) target = $region33
    $region32: #{tpu_custom_call.1} parent=1 // pred_region
      %595 = dma.done [#allocation5], 256
    $region33: #{tpu_custom_call.1} parent=1 // pred_fallthru
      _
    %596 = vsyncpa [#allocation4], 1
    %597 = vsyncpa [#allocation7], 1
    %598 = vsyncpa [#allocation5], 1

</llo_original>
